<compile_context>
chip_gen: v7x
topology: tpu7x:2x2x1
jax: 0.10.0
libtpu: 0.0.40
codegen_flags: <defaults>
</compile_context>

<pallas_src>
import jax
import jax.numpy as jnp
from jax.experimental import pallas as pl
from jax.experimental.pallas import tpu as pltpu


# ----------------------------------------------------------------------------
# Pallas kernel: o_tile = W_blockdiag @ x_tile   (1x1 conv hot path)
# ----------------------------------------------------------------------------
def invconv_matmul_kernel(w_ref, x_ref, o_ref):
    # w_ref: (R, R) block-diagonal channel-mix weight (constant every step)
    # x_ref: (R, TP) tile: R = b_tile*C rows of flattened pixels
    # o_ref: (R, TP) output tile
    o_ref[...] = jnp.dot(
        w_ref[...], x_ref[...], preferred_element_type=jnp.float32
    ).astype(o_ref.dtype)


def _round_down_multiple(x, m):
    return (x // m) * m


def _chip_defaults():
    """(r_target, vmem_budget_bytes, vmem_limit_bytes, min_grid_steps)."""
    kind = ""
    try:
        kind = jax.devices()[0].device_kind.lower()
    except Exception:
        pass
    if "v7" in kind:
        # 64 MiB VMEM per TensorCore, 2 TCs -> smaller budget, feed both cores.
        return 256, 16 * 1024 * 1024, 40 * 1024 * 1024, 4
    if "v5" in kind:
        # 1 TC; keep R at 128 so the f32 dense block-diagonal matmul stays
        # safely below v5e's compute/HBM ridge.
        return 128, 16 * 1024 * 1024, 64 * 1024 * 1024, 1
    # v6e (and unknown): 128 MiB physical VMEM, 1 TC.
    return 256, 28 * 1024 * 1024, 64 * 1024 * 1024, 1


def _pick_b_tile(n, c, r_target):
    """Batch elements packed per row block.  R = b*c must be sublane-dense
    (R % 8 == 0) with N % b == 0; among those, pick the largest R <= r_target
    (MXU-friendly contraction size, caps the kron weight at ~256x256)."""
    candidates = [b for b in range(1, n + 1)
                  if n % b == 0 and (b * c) % 8 == 0]
    if not candidates:
        # Single full-extent row block (always a legal block shape even when
        # N*C is not a multiple of 8).
        return n
    under = [b for b in candidates if b * c <= r_target]
    return max(under) if under else min(candidates)


def _pick_tile_p(r, p, vmem_budget_bytes, itemsize=4):
    """Largest lane-dense pixel tile such that the double-buffered in+out
    tiles plus the (double-buffered) expanded weight fit the budget."""
    weight_bytes = 2 * r * r * itemsize
    budget = max(0, vmem_budget_bytes - weight_bytes)
    cap = max(128, budget // (4 * r * itemsize))
    if cap >= p:
        return p                         # full pixel extent: legal block shape
    return max(128, _round_down_multiple(min(cap, p), 128))


def invconv_apply(weight, x2d, b_tile, *, vmem_budget_bytes, vmem_limit_bytes,
                  min_grid_steps=1, tile_p=None):
    """weight: (C, C); x2d: (N*C, P) row-major view of the NCHW input."""
    C = weight.shape[0]
    NC, P = x2d.shape
    R = b_tile * C
    assert NC % R == 0, "_pick_b_tile guarantees this"

    # Block-diagonal expansion: one row block = b_tile whole batch elements.
    if b_tile > 1:
        w_big = jnp.kron(jnp.eye(b_tile, dtype=weight.dtype), weight)
    else:
        w_big = weight

    if tile_p is None:
        tile_p = _pick_tile_p(R, P, vmem_budget_bytes)

    row_tiles = NC // R
    # v7x: make sure both TensorCores get work (best effort, stays lane-dense).
    if min_grid_steps > 1 and row_tiles * pl.cdiv(P, tile_p) < min_grid_steps:
        want = -(-min_grid_steps // row_tiles)                       # ceil
        tile_p = min(tile_p, max(128, _round_down_multiple(P // want, 128)))

    grid = (row_tiles, pl.cdiv(P, tile_p))

    # Executed work: dense R-wide block-diagonal matmul (not just the C-wide
    # useful MACs), plus read x / write out / read expanded weight once.
    flops = 2 * R * NC * P
    bytes_accessed = 4 * (2 * NC * P + R * R)

    return pl.pallas_call(
        invconv_matmul_kernel,
        out_shape=jax.ShapeDtypeStruct((NC, P), x2d.dtype),
        grid_spec=pltpu.PrefetchScalarGridSpec(
            num_scalar_prefetch=0,
            grid=grid,
            in_specs=[
                # Weight: same block every step -> stays resident in VMEM.
                pl.BlockSpec((R, R), lambda r, i: (0, 0)),
                # Pixel tile.  A ragged last tile uses padded loads / masked
                # stores; safe because the contraction is over rows and the
                # block-diagonal weight keeps C-blocks independent.
                pl.BlockSpec((R, tile_p), lambda r, i: (r, i)),
            ],
            out_specs=pl.BlockSpec((R, tile_p), lambda r, i: (r, i)),
        ),
        compiler_params=pltpu.CompilerParams(
            dimension_semantics=("parallel", "parallel"),
            vmem_limit_bytes=vmem_limit_bytes,
        ),
        cost_estimate=pl.CostEstimate(
            flops=flops, transcendentals=0, bytes_accessed=bytes_accessed
        ),
        # TODO(synk): sweep pipeline_mode=pl.Buffered(3) on the pixel-tile
        # BlockSpecs on v7x if exposed DMA gaps show up in the trace.
    )(w_big, x2d)


# ----------------------------------------------------------------------------
# Parameter setup (deterministic, mirrors InvConv2dLU.__init__) -- JAX glue
# ----------------------------------------------------------------------------
def init_invconv_params(key, in_channel):
    w0 = jax.random.normal(key, (in_channel, in_channel), dtype=jnp.float32)
    q, _ = jnp.linalg.qr(w0)
    w_p, w_l, w_u_full = jax.scipy.linalg.lu(q.astype(jnp.float32))
    w_s = jnp.diag(w_u_full)
    w_u = jnp.triu(w_u_full, 1)
    u_mask = jnp.triu(jnp.ones_like(w_u), 1)
    l_mask = u_mask.T
    params = dict(
        w_p=w_p,
        w_l=w_l,                                   # nn.Parameter
        w_s=jnp.log(jnp.abs(w_s) + 1e-06),         # nn.Parameter (as in spec)
        w_u=w_u,                                   # nn.Parameter
        u_mask=u_mask,
        l_mask=l_mask,
        s_sign=jnp.sign(w_s),
        l_eye=jnp.eye(in_channel, dtype=jnp.float32),
    )
    return params


def calc_weight(p):
    # weight = w_p @ (w_l*l_mask + I) @ (w_u*u_mask + diag(s_sign*exp(w_s)))
    lower = p["w_l"] * p["l_mask"] + p["l_eye"]
    upper = p["w_u"] * p["u_mask"] + jnp.diag(p["s_sign"] * jnp.exp(p["w_s"]))
    return p["w_p"] @ lower @ upper  # (C, C); conv kernel is this, unsqueezed


# ----------------------------------------------------------------------------
# Forward pass (reverse=False path): returns (out NCHW, logdet scalar)
# ----------------------------------------------------------------------------
def invconv2dlu_forward(params, x_nchw):
    N, C, H, W = x_nchw.shape
    weight = calc_weight(params)                      # (C, C)

    r_target, vmem_budget, vmem_limit, min_steps = _chip_defaults()
    b_tile = _pick_b_tile(N, C, r_target)             # static-shape decision
    x2d = x_nchw.reshape(N * C, H * W)                # free view, no transpose
    y2d = invconv_apply(weight, x2d, b_tile,
                        vmem_budget_bytes=vmem_budget,
                        vmem_limit_bytes=vmem_limit,
                        min_grid_steps=min_steps)     # Pallas kernel
    out = y2d.reshape(N, C, H, W)                     # free view back to NCHW

    # logdet = pixels(input) * sum(w_s)   (tiny reduction, done in glue)
    logdet = jnp.float32(H * W) * jnp.sum(params["w_s"])
    return out, logdet


if __name__ == "__main__":
    key = jax.random.PRNGKey(0)
    k_param, k_x = jax.random.split(key)

    C = 4
    params = init_invconv_params(k_param, C)

    x = jax.random.normal(k_x, (2, C, 16, 16), dtype=jnp.float32)  # NCHW

    out, logdet = jax.jit(invconv2dlu_forward)(params, x)
    out = jax.block_until_ready(out)
    logdet = jax.block_until_ready(logdet)

    # Reference check against plain-JAX 1x1 conv (= einsum over channels).
    w = calc_weight(params)
    out_ref = jnp.einsum("oc,nchw->nohw", w, x)
    logdet_ref = jnp.float32(16 * 16) * jnp.sum(params["w_s"])
    assert out.shape == x.shape and out.dtype == x.dtype
    assert jnp.allclose(out, out_ref, atol=1e-5, rtol=1e-5)
    assert jnp.allclose(logdet, logdet_ref, atol=1e-6)

    print("KERNEL_OK")
</pallas_src>

<mosaic_0001>
module attributes {stable_mosaic.version = 11 : i64} {
  func.func @invconv_matmul_kernel(%arg0: i32, %arg1: i32, %arg2: memref<8x8xf32, #tpu.memory_space<vmem>>, %arg3: memref<8x256xf32, #tpu.memory_space<vmem>>, %arg4: memref<8x256xf32, #tpu.memory_space<vmem>>) attributes {dimension_semantics = [#tpu.dimension_semantics<parallel>, #tpu.dimension_semantics<parallel>], iteration_bounds = array<i64: 1, 1>, scalar_prefetch = 0 : i64, scratch_operands = 0 : i64, tpu.core_type = #tpu.core_type<tc>, window_params = [{pipeline_mode = #tpu.pipeline_mode<synchronous>, transform_indices = @transform_0, window_bounds = array<i64: 8, 8>}, {transform_indices = @transform_1, window_bounds = array<i64: 8, 256>}, {transform_indices = @transform_2, window_bounds = array<i64: 8, 256>}]} {
    %c0 = arith.constant 0 : index
    %c0_0 = arith.constant 0 : index
    %0 = vector.load %arg2[%c0, %c0_0] : memref<8x8xf32, #tpu.memory_space<vmem>>, vector<8x8xf32>
    %c0_1 = arith.constant 0 : index
    %c0_2 = arith.constant 0 : index
    %1 = vector.load %arg3[%c0_1, %c0_2] : memref<8x256xf32, #tpu.memory_space<vmem>>, vector<8x256xf32>
    %cst = arith.constant dense<0.000000e+00> : vector<8x256xf32>
    %2 = tpu.matmul %0, %1, %cst {dimension_numbers = #tpu.dot_dimension_numbers<[1], [0], [0], [1], [0, 0, 1, 1], [], []>} : vector<8x8xf32>, vector<8x256xf32>, vector<8x256xf32> -> vector<8x256xf32>
    %c0_3 = arith.constant 0 : index
    %c0_4 = arith.constant 0 : index
    %3 = vector.load %arg4[%c0_3, %c0_4] : memref<8x256xf32, #tpu.memory_space<vmem>>, vector<8x256xf32>
    tpu.vector_store %arg4[%c0_3, %c0_4], %2 {strides = array<i32>} : memref<8x256xf32, #tpu.memory_space<vmem>>, vector<8x256xf32>,
    return
  }
  func.func @transform_0(%arg0: i32, %arg1: i32) -> (i32, i32) {
    %c0_i32 = arith.constant 0 : i32
    %c0_i32_0 = arith.constant 0 : i32
    %c0_i32_1 = arith.constant 0 : i32
    return %c0_i32, %c0_i32_0 : i32, i32
  }
  func.func @transform_1(%arg0: i32, %arg1: i32) -> (i32, i32) {
    %c0_i32 = arith.constant 0 : i32
    return %arg0, %arg1 : i32, i32
  }
  func.func @transform_2(%arg0: i32, %arg1: i32) -> (i32, i32) {
    %c0_i32 = arith.constant 0 : i32
    return %arg0, %arg1 : i32, i32
  }
}

</mosaic_0001>

<llo_original>
// kernel: invconv2dlu_forward.1
$region0: #{invconv2dlu_forward.1}
  #allocation0 [shape = 'u32[]', space=smem, size = 0x4, offset = 0x4, fixed_abs, tag = 'smem constant byte address 0x4 - core index']
  #allocation1 [shape = 'u32[144,128]{1,0:T(1,128)}', space=vmem, size = 0x12000, scoped, tag = 'internal scratch']
  %s0 = inlined_call_operand.hbm [shape: f32[8,8], index: 0, kind: input, shape index: {}]
  %s1 = inlined_call_operand.hbm [shape: f32[8,256], index: 1, kind: input, shape index: {}]
  %s2 = inlined_call_operand.hbm [shape: f32[8,256], index: 2, kind: output, shape index: {}]
  %s3 = sld [smem:[#allocation0]]
  $region26: #{invconv2dlu_forward.1} parent=0
    _
  %s5 = ssub.s32 1, %s3
  %s6 = scalar_select 0, %s5, %s3
  $region1: #{invconv2dlu_forward.1} parent=0
    #allocation2 [shape = 'u8[4096]{0}', space=vmem, size = 0x1000, scoped, tag = 'input window, operand 0, single buffered']
    #allocation3 [shape = 's32[1]{0}', space=sflag, size = 0x4, scoped, tag = 'scoped memory for invconv2dlu_forward.1']
    #allocation4 [shape = 's32[1]{0}', space=sflag, size = 0x4, scoped, tag = 'scoped memory for invconv2dlu_forward.1']
    #allocation5 [shape = 'u8[8192]{0}', space=vmem, size = 0x2000, scoped, tag = 'input window, operand 1, single buffered']
    #allocation6 [shape = 's32[1]{0}', space=sflag, size = 0x4, scoped, tag = 'scoped memory for invconv2dlu_forward.1']
    #allocation7 [shape = 'u8[8192]{0}', space=vmem, size = 0x2000, scoped, tag = 'output window, operand 0, single buffered']
    %7 = vsyncpa [#allocation3], 0
    %8 = vsyncpa [#allocation6], 0
    %9 = vsyncpa [#allocation4], 0
    // Predicated region
    $region2: #{invconv2dlu_forward.1} parent=1 // pred_check
      _
    $region3: #{invconv2dlu_forward.1} parent=1 // pred_check_branch
      %11 = sbr.rel (0) target = $region5
    $region4: #{invconv2dlu_forward.1} parent=1 // pred_region
      %s13 = ssub.s32 128, 128
      %14 = vsyncadd [#allocation3], %s13
      %s16 = sshll.u32 [#allocation2], 4
      %s17 = int_to_ptr.vmem [resolvable:$true] %s16
      %19 = dma.hbm_to_vmem [thread:$0]  %s0, 128, %s17, [#allocation3]
    $region5: #{invconv2dlu_forward.1} parent=1 // pred_fallthru
      _
    // Predicated region
    $region6: #{invconv2dlu_forward.1} parent=1 // pred_check
      _
    $region7: #{invconv2dlu_forward.1} parent=1 // pred_check_branch
      %21 = sbr.rel (0) target = $region9
    $region8: #{invconv2dlu_forward.1} parent=1 // pred_region
      %s23 = ssub.s32 256, 256
      %24 = vsyncadd [#allocation6], %s23
      %s26 = sshll.u32 [#allocation5], 4
      %s27 = int_to_ptr.vmem [resolvable:$true] %s26
      %29 = dma.hbm_to_vmem [thread:$0]  %s1, 256, %s27, [#allocation6]
    $region9: #{invconv2dlu_forward.1} parent=1 // pred_fallthru
      _
    // Predicated region
    $region10: #{invconv2dlu_forward.1} parent=1 // pred_check
      _
    $region11: #{invconv2dlu_forward.1} parent=1 // pred_check_branch
      %31 = sbr.rel (0) target = $region13
    $region12: #{invconv2dlu_forward.1} parent=1 // pred_region
      %32 = dma.done [#allocation3], 128
    $region13: #{invconv2dlu_forward.1} parent=1 // pred_fallthru
      _
    // Predicated region
    $region14: #{invconv2dlu_forward.1} parent=1 // pred_check
      _
    $region15: #{invconv2dlu_forward.1} parent=1 // pred_check_branch
      %34 = sbr.rel (0) target = $region17
    $region16: #{invconv2dlu_forward.1} parent=1 // pred_region
      %35 = dma.done [#allocation6], 256
    $region17: #{invconv2dlu_forward.1} parent=1 // pred_fallthru
      _
    %v36 = vld [vmem:[#allocation2] sm:$0xff]
    %v37 = vld [vmem:[#allocation5] sm:$0xff]
    %v38 = vld [vmem:[#allocation5 + $0x8] sm:$0xff]
    %vm39 = vcmask 64512
    %v41 = vsel %vm39, %v36, 0
    %43 = vmatprep.subr.mxu0 %v38
    %44 = vmatpush1.msra.mxu0 %v37
    %45 = vmatprep.subr.mxu0 0.0
    %46 = vmatpush1.msra.mxu0 0.0
    %47 = vmatprep.subr.mxu0 0.0
    %48 = vmatpush1.msra.mxu0 0.0
    %49 = vmatprep.subr.mxu0 0.0
    %50 = vmatpush1.msra.mxu0 0.0
    %51 = vmatprep.subr.mxu0 0.0
    %52 = vmatpush1.msra.mxu0 0.0
    %53 = vmatprep.subr.mxu0 0.0
    %54 = vmatpush1.msra.mxu0 0.0
    %55 = vmatprep.subr.mxu0 0.0
    %56 = vmatpush1.msra.mxu0 0.0
    %57 = vmatprep.subr.mxu0 0.0
    %58 = vmatpush1.msra.mxu0 0.0
    %59 = vmatprep.subr.mxu0 0.0
    %60 = vmatpush1.msra.mxu0 0.0
    %61 = vmatprep.subr.mxu0 0.0
    %62 = vmatpush1.msra.mxu0 0.0
    %63 = vmatprep.subr.mxu0 0.0
    %64 = vmatpush1.msra.mxu0 0.0
    %65 = vmatprep.subr.mxu0 0.0
    %66 = vmatpush1.msra.mxu0 0.0
    %67 = vmatprep.subr.mxu0 0.0
    %68 = vmatpush1.msra.mxu0 0.0
    %69 = vmatprep.subr.mxu0 0.0
    %70 = vmatpush1.msra.mxu0 0.0
    %71 = vmatprep.subr.mxu0 0.0
    %72 = vmatpush1.msra.mxu0 0.0
    %73 = vmatprep.subr.mxu0 0.0
    %74 = vmatpush1.msra.mxu0 0.0
    %75 = vmatprep.subr.mxu0 0.0
    %76 = vmatpush1.msra.mxu0 0.0
    %77 = vmatprep.subr.mxu0 0.0
    %78 = vmatpush1.msra.mxu0 0.0
    %79 = vmatprep.subr.mxu0 0.0
    %80 = vmatpush1.msra.mxu0 0.0
    %81 = vmatprep.subr.mxu0 0.0
    %82 = vmatpush1.msra.mxu0 0.0
    %83 = vmatprep.subr.mxu0 0.0
    %84 = vmatpush1.msra.mxu0 0.0
    %85 = vmatprep.subr.mxu0 0.0
    %86 = vmatpush1.msra.mxu0 0.0
    %87 = vmatprep.subr.mxu0 0.0
    %88 = vmatpush1.msra.mxu0 0.0
    %89 = vmatprep.subr.mxu0 0.0
    %90 = vmatpush1.msra.mxu0 0.0
    %91 = vmatprep.subr.mxu0 0.0
    %92 = vmatpush1.msra.mxu0 0.0
    %93 = vmatprep.subr.mxu0 0.0
    %94 = vmatpush1.msra.mxu0 0.0
    %95 = vmatprep.subr.mxu0 0.0
    %96 = vmatpush1.msra.mxu0 0.0
    %97 = vmatprep.subr.mxu0 0.0
    %98 = vmatpush1.msra.mxu0 0.0
    %99 = vmatprep.subr.mxu0 0.0
    %100 = vmatpush1.msra.mxu0 0.0
    %101 = vmatprep.subr.mxu0 0.0
    %102 = vmatpush1.msra.mxu0 0.0
    %103 = vmatprep.subr.mxu0 0.0
    %104 = vmatpush1.msra.mxu0 0.0
    %105 = vmatprep.subr.mxu0 0.0
    %106 = vmatpush1.msra.mxu0 0.0
    %107 = vmatprep.mubr.f32.mxu0 0.0
    %108 = vmatmul.mubr.f32.gmra.mrb[0].mxu0 %v41
    %v109 = vpop.f32.mrb[0].mxu0
    %v110 = vadd.f32 0.0, %v109
    %v111 = vpop.f32.mrb[0].mxu0
    %v112 = vadd.f32 0.0, %v111
    %113 = vdwg.mxu0
    %114 = vst [vmem:[#allocation7] sm:$0xff] %v110
    %115 = vst [vmem:[#allocation7 + $0x8] sm:$0xff] %v112
    // Predicated region
    $region18: #{invconv2dlu_forward.1} parent=1 // pred_check
      _
    $region19: #{invconv2dlu_forward.1} parent=1 // pred_check_branch
      %117 = sbr.rel (0) target = $region21
    $region20: #{invconv2dlu_forward.1} parent=1 // pred_region
      %s119 = ssub.s32 256, 256
      %120 = vsyncadd [#allocation4], %s119
      %s122 = sshll.u32 [#allocation7], 4
      %s123 = int_to_ptr.vmem [resolvable:$true] %s122
      %125 = dma.vmem_to_hbm [thread:$0]  %s123, 256, %s2, [#allocation4]
    $region21: #{invconv2dlu_forward.1} parent=1 // pred_fallthru
      _
    // Predicated region
    $region22: #{invconv2dlu_forward.1} parent=1 // pred_check
      _
    $region23: #{invconv2dlu_forward.1} parent=1 // pred_check_branch
      %127 = sbr.rel (0) target = $region25
    $region24: #{invconv2dlu_forward.1} parent=1 // pred_region
      %128 = dma.done [#allocation4], 256
    $region25: #{invconv2dlu_forward.1} parent=1 // pred_fallthru
      _
    %129 = vsyncpa [#allocation3], 1
    %130 = vsyncpa [#allocation6], 1
    %131 = vsyncpa [#allocation4], 1

</llo_original>
